<compile_context>
chip_gen: v7x
topology: tpu7x:2x2x1
jax: 0.10.0
libtpu: 0.0.40
codegen_flags: <defaults>
</compile_context>

<pallas_src>
import functools

import jax
import jax.numpy as jnp
from jax.experimental import pallas as pl
from jax.experimental.pallas import tpu as pltpu

# ---------------- static architecture / problem sizes ----------------
P = 5            # num_prev_nodes
N = 2            # batch
C = 8            # out_shape (channels)
H = W = 16       # spatial
BLOCK_PER_EDGE = tuple(i % 5 for i in range(P))   # edge i -> block (i % 5)
CHOSEN = (0, 2)                                   # InputChoice: n_chosen=2, summed

# Sanity: the kernel below is specialized to "chosen[0] is the 3x3-conv edge,
# chosen[1] is the 3x3-max-pool edge".
assert BLOCK_PER_EDGE[CHOSEN[0]] == 0 and BLOCK_PER_EDGE[CHOSEN[1]] == 2

NEG_BIG = -1e30  # stand-in for -inf padding of the max-pool halo


def _node_kernel(x0_ref, x2_ref, wd_ref, b3_ref, o_ref):
    """Fused Node forward for the sampled architecture (conv edge + max-pool edge).

    x0_ref : (1, H+2, (W+2)*C)  zero-padded conv-edge input, lane-dense NHWC
    x2_ref : (1, H+2, (W+2)*C)  NEG_BIG-padded max-pool-edge input, lane-dense NHWC
    wd_ref : (3*(W+2)*C, W*C)   banded 3x3-conv weight (one im2col-style matmul)
    b3_ref : (1, 1, W*C)        conv bias, tiled per output (w, c) lane
    o_ref  : (1, H, W*C)        sum of the two chosen edge outputs (lane-dense)
    """
    Nb, Hp, WCp = x0_ref.shape
    Hh = Hp - 2                      # H
    WC = o_ref.shape[2]              # W*C (128 lanes)
    Cc = (WCp - WC) // 2             # C

    # ---- edge 0 : block1 = 3x3 conv (pad 1) + ReLU as ONE MXU matmul ----------
    x0 = x0_ref[...]                                             # (1, H+2, (W+2)*C)
    # im2col over the vertical taps only: concat 3 row-shifted slabs along lanes.
    lhs = jnp.concatenate([x0[:, dh:dh + Hh, :] for dh in range(3)], axis=-1)
    lhs = lhs.reshape(Nb * Hh, 3 * WCp)                          # (H, 3*(W+2)*C) = (16, 432)
    yc = jnp.dot(lhs, wd_ref[...],
                 preferred_element_type=jnp.float32)             # (H, W*C) = (16, 128)
    yc = yc.reshape(Nb, Hh, WC)
    yc = jnp.maximum(yc + b3_ref[...], 0.0)                      # bias + ReLU, lane-dense

    # ---- edge 2 : block3 = 3x3 max-pool, stride 1, pad 1 (halo = NEG_BIG) -----
    x2 = x2_ref[...]                                             # (1, H+2, (W+2)*C)
    r = jnp.maximum(jnp.maximum(x2[:, 0:Hh, :], x2[:, 1:Hh + 1, :]),
                    x2[:, 2:Hh + 2, :])                          # vertical max  (1, H, (W+2)*C)
    yp = jnp.maximum(jnp.maximum(r[:, :, 0:WC], r[:, :, Cc:Cc + WC]),
                     r[:, :, 2 * Cc:2 * Cc + WC])                # horizontal max (1, H, W*C)

    # ---- InputChoice(n_chosen=2): sum of the two chosen edges ------------------
    o_ref[...] = yc + yp                                         # full-lane unmasked store


def node_forward(prev_nodes_nchw, w3, b3, w1=None, b1=None):
    """prev_nodes_nchw: (P, N, C, H, W) float32  ->  (N, C, H, W) float32.

    w1/b1 (1x1-conv params) belong to edges the InputChoice never selects in this
    fixed architecture; they are accepted for API parity but never sent to the kernel.
    """
    Pn, Nn, Cc, Hh, Ww = prev_nodes_nchw.shape
    Wp2 = Ww + 2
    e_conv, e_pool = CHOSEN

    # --- glue (wrapper-side, tiny): NCHW -> NHWC, bake the 1-px halo, lane-densify.
    def lane_dense_padded(x_nchw, pad_value):
        x = jnp.transpose(x_nchw, (0, 2, 3, 1))                              # (N,H,W,C)
        xp = jnp.pad(x, ((0, 0), (1, 1), (1, 1), (0, 0)),
                     constant_values=pad_value)                              # (N,H+2,W+2,C)
        return xp.reshape(Nn, Hh + 2, Wp2 * Cc)                              # lane-dense

    x0 = lane_dense_padded(prev_nodes_nchw[e_conv], 0.0)       # conv edge: zero halo
    x2 = lane_dense_padded(prev_nodes_nchw[e_pool], NEG_BIG)   # pool edge: -inf-ish halo

    # --- banded conv weight: Wd[(dh, j, ci), (w, co)] = w3[dh, j-w, ci, co] for j-w in {0,1,2}
    w3e = w3[e_conv]                                                         # (3,3,C,C)
    sel = (jnp.arange(Wp2)[None, :, None]
           == (jnp.arange(Ww)[None, None, :] + jnp.arange(3)[:, None, None])
           ).astype(jnp.float32)                                             # (3, W+2, W)
    Wd = jnp.einsum('hdio,djw->hjiwo', w3e, sel).reshape(3 * Wp2 * Cc, Ww * Cc)  # (432, 128)

    # --- conv bias tiled per (w, c) output lane
    b3_lane = jnp.tile(b3[e_conv].reshape(Cc), Ww).reshape(1, 1, Ww * Cc)    # (1,1,128)

    out_lane = pl.pallas_call(
        _node_kernel,
        out_shape=jax.ShapeDtypeStruct((Nn, Hh, Ww * Cc), jnp.float32),
        grid=(Nn,),
        in_specs=[
            pl.BlockSpec((1, Hh + 2, Wp2 * Cc), lambda i: (i, 0, 0)),
            pl.BlockSpec((1, Hh + 2, Wp2 * Cc), lambda i: (i, 0, 0)),
            pl.BlockSpec((3 * Wp2 * Cc, Ww * Cc), lambda i: (0, 0)),
            pl.BlockSpec((1, 1, Ww * Cc), lambda i: (0, 0, 0)),
        ],
        out_specs=pl.BlockSpec((1, Hh, Ww * Cc), lambda i: (i, 0, 0)),
        compiler_params=pltpu.CompilerParams(
            dimension_semantics=("parallel",)),   # lets v7x use both TensorCores
    )(x0, x2, Wd, b3_lane)

    out = out_lane.reshape(Nn, Hh, Ww, Cc)
    return jnp.transpose(out, (0, 3, 1, 2))                                  # back to NCHW


def node_forward_ref(prev_nodes_nchw, w3, b3, w1, b1):
    """Plain-JAX reference computing the FULL original semantics (all 5 edges,
    all 5 candidate blocks, InputChoice sum of CHOSEN) — validates the pruning."""
    x = jnp.transpose(prev_nodes_nchw, (0, 1, 3, 4, 2))
    xpad = jnp.pad(x, ((0, 0), (0, 0), (1, 1), (1, 1), (0, 0)))
    Pn, Nn, Hp, Wp, Cc = xpad.shape
    Hh, Ww = Hp - 2, Wp - 2
    mask4 = jnp.pad(jnp.ones((Hh, Ww), jnp.float32),
                    ((1, 1), (1, 1)))[None, :, :, None] > 0.5
    acc = jnp.zeros((Nn, Hh, Ww, Cc), jnp.float32)
    for e in range(Pn):
        xp = xpad[e]
        blk = BLOCK_PER_EDGE[e]
        if blk == 0:
            y = sum(jnp.einsum('nhwc,cd->nhwd',
                               xp[:, dh:dh + Hh, dw:dw + Ww, :], w3[e, dh, dw])
                    for dh in range(3) for dw in range(3))
            y = jax.nn.relu(y + b3[e])
        elif blk == 1:
            y = jax.nn.relu(jnp.einsum('nhwc,cd->nhwd',
                                       xp[:, 1:1 + Hh, 1:1 + Ww, :], w1[e]) + b1[e])
        elif blk == 2:
            xm = jnp.where(mask4, xp, NEG_BIG)
            y = functools.reduce(jnp.maximum,
                                 [xm[:, dh:dh + Hh, dw:dw + Ww, :]
                                  for dh in range(3) for dw in range(3)])
        elif blk == 3:
            y = sum(xp[:, dh:dh + Hh, dw:dw + Ww, :]
                    for dh in range(3) for dw in range(3)) / 9.0
        else:
            y = xp[:, 1:1 + Hh, 1:1 + Ww, :]
        if e in CHOSEN:
            acc = acc + y
    return jnp.transpose(acc, (0, 3, 1, 2))


if __name__ == "__main__":
    key = jax.random.PRNGKey(0)
    k_x, k_w3, k_b3, k_w1, k_b1 = jax.random.split(key, 5)

    # prev_nodes: P tensors of shape (N, C, H, W), stacked
    prev_nodes = jax.random.normal(k_x, (P, N, C, H, W), jnp.float32)

    # deterministic synthetic parameters (one set per edge; unused ones ignored)
    w3 = jax.random.normal(k_w3, (P, 3, 3, C, C), jnp.float32) * 0.1
    b3 = jax.random.normal(k_b3, (P, 1, 1, 1, C), jnp.float32) * 0.1
    w1 = jax.random.normal(k_w1, (P, C, C), jnp.float32) * 0.1
    b1 = jax.random.normal(k_b1, (P, 1, 1, 1, C), jnp.float32) * 0.1

    out = jax.jit(node_forward)(prev_nodes, w3, b3, w1, b1)
    out = jax.block_until_ready(out)

    ref = node_forward_ref(prev_nodes, w3, b3, w1, b1)
    assert out.shape == (N, C, H, W)
    assert jnp.allclose(out, ref, atol=1e-4, rtol=1e-4), "mismatch vs reference"

    print("KERNEL_OK")
</pallas_src>

<mosaic_0001>
module attributes {stable_mosaic.version = 11 : i64} {
  func.func @_node_kernel(%arg0: i32, %arg1: memref<1x18x144xf32, #tpu.memory_space<vmem>>, %arg2: memref<1x18x144xf32, #tpu.memory_space<vmem>>, %arg3: memref<432x128xf32, #tpu.memory_space<vmem>>, %arg4: memref<1x1x128xf32, #tpu.memory_space<vmem>>, %arg5: memref<1x16x128xf32, #tpu.memory_space<vmem>>) attributes {dimension_semantics = [#tpu.dimension_semantics<parallel>], iteration_bounds = array<i64: 2>, scalar_prefetch = 0 : i64, scratch_operands = 0 : i64, tpu.core_type = #tpu.core_type<tc>, window_params = [{transform_indices = @transform_0, window_bounds = array<i64: 1, 18, 144>}, {transform_indices = @transform_1, window_bounds = array<i64: 1, 18, 144>}, {pipeline_mode = #tpu.pipeline_mode<synchronous>, transform_indices = @transform_2, window_bounds = array<i64: 432, 128>}, {pipeline_mode = #tpu.pipeline_mode<synchronous>, transform_indices = @transform_3, window_bounds = array<i64: 1, 1, 128>}, {transform_indices = @transform_4, window_bounds = array<i64: 1, 16, 128>}]} {
    %c0 = arith.constant 0 : index
    %c0_0 = arith.constant 0 : index
    %c0_1 = arith.constant 0 : index
    %0 = vector.load %arg1[%c0, %c0_0, %c0_1] : memref<1x18x144xf32, #tpu.memory_space<vmem>>, vector<1x18x144xf32>
    %1 = vector.extract_strided_slice %0 {offsets = [0, 0, 0], sizes = [1, 16, 144], strides = [1, 1, 1]} : vector<1x18x144xf32> to vector<1x16x144xf32>
    %2 = vector.extract_strided_slice %0 {offsets = [0, 1, 0], sizes = [1, 16, 144], strides = [1, 1, 1]} : vector<1x18x144xf32> to vector<1x16x144xf32>
    %3 = vector.extract_strided_slice %0 {offsets = [0, 2, 0], sizes = [1, 16, 144], strides = [1, 1, 1]} : vector<1x18x144xf32> to vector<1x16x144xf32>
    %4 = tpu.concatenate %1, %2, %3 in 2 : vector<1x16x144xf32>, vector<1x16x144xf32>, vector<1x16x144xf32> -> vector<1x16x432xf32>
    %5 = vector.shape_cast %4 : vector<1x16x432xf32> to vector<16x432xf32>
    %c0_2 = arith.constant 0 : index
    %c0_3 = arith.constant 0 : index
    %6 = vector.load %arg3[%c0_2, %c0_3] : memref<432x128xf32, #tpu.memory_space<vmem>>, vector<432x128xf32>
    %cst = arith.constant dense<0.000000e+00> : vector<16x128xf32>
    %7 = tpu.matmul %5, %6, %cst {dimension_numbers = #tpu.dot_dimension_numbers<[1], [0], [0], [1], [0, 0, 1, 1], [], []>} : vector<16x432xf32>, vector<432x128xf32>, vector<16x128xf32> -> vector<16x128xf32>
    %8 = vector.shape_cast %7 : vector<16x128xf32> to vector<1x16x128xf32>
    %c0_4 = arith.constant 0 : index
    %c0_5 = arith.constant 0 : index
    %c0_6 = arith.constant 0 : index
    %9 = vector.load %arg4[%c0_4, %c0_5, %c0_6] : memref<1x1x128xf32, #tpu.memory_space<vmem>>, vector<1x1x128xf32>
    %10 = vector.broadcast %9 : vector<1x1x128xf32> to vector<1x16x128xf32>
    %11 = arith.addf %8, %10 : vector<1x16x128xf32>
    %cst_7 = arith.constant 0.000000e+00 : f32
    %12 = vector.broadcast %cst_7 : f32 to vector<1x16x128xf32>
    %13 = arith.maximumf %11, %12 : vector<1x16x128xf32>
    %c0_8 = arith.constant 0 : index
    %c0_9 = arith.constant 0 : index
    %c0_10 = arith.constant 0 : index
    %14 = vector.load %arg2[%c0_8, %c0_9, %c0_10] : memref<1x18x144xf32, #tpu.memory_space<vmem>>, vector<1x18x144xf32>
    %15 = vector.extract_strided_slice %14 {offsets = [0, 0, 0], sizes = [1, 16, 144], strides = [1, 1, 1]} : vector<1x18x144xf32> to vector<1x16x144xf32>
    %16 = vector.extract_strided_slice %14 {offsets = [0, 1, 0], sizes = [1, 16, 144], strides = [1, 1, 1]} : vector<1x18x144xf32> to vector<1x16x144xf32>
    %17 = arith.maximumf %15, %16 : vector<1x16x144xf32>
    %18 = vector.extract_strided_slice %14 {offsets = [0, 2, 0], sizes = [1, 16, 144], strides = [1, 1, 1]} : vector<1x18x144xf32> to vector<1x16x144xf32>
    %19 = arith.maximumf %17, %18 : vector<1x16x144xf32>
    %20 = vector.extract_strided_slice %19 {offsets = [0, 0, 0], sizes = [1, 16, 128], strides = [1, 1, 1]} : vector<1x16x144xf32> to vector<1x16x128xf32>
    %21 = vector.extract_strided_slice %19 {offsets = [0, 0, 8], sizes = [1, 16, 128], strides = [1, 1, 1]} : vector<1x16x144xf32> to vector<1x16x128xf32>
    %22 = arith.maximumf %20, %21 : vector<1x16x128xf32>
    %23 = vector.extract_strided_slice %19 {offsets = [0, 0, 16], sizes = [1, 16, 128], strides = [1, 1, 1]} : vector<1x16x144xf32> to vector<1x16x128xf32>
    %24 = arith.maximumf %22, %23 : vector<1x16x128xf32>
    %25 = arith.addf %13, %24 : vector<1x16x128xf32>
    %c0_11 = arith.constant 0 : index
    %c0_12 = arith.constant 0 : index
    %c0_13 = arith.constant 0 : index
    %26 = vector.load %arg5[%c0_11, %c0_12, %c0_13] : memref<1x16x128xf32, #tpu.memory_space<vmem>>, vector<1x16x128xf32>
    tpu.vector_store %arg5[%c0_11, %c0_12, %c0_13], %25 {strides = array<i32>} : memref<1x16x128xf32, #tpu.memory_space<vmem>>, vector<1x16x128xf32>,
    return
  }
  func.func @transform_0(%arg0: i32) -> (i32, i32, i32) {
    %c0_i32 = arith.constant 0 : i32
    %c0_i32_0 = arith.constant 0 : i32
    %c0_i32_1 = arith.constant 0 : i32
    return %arg0, %c0_i32, %c0_i32_0 : i32, i32, i32
  }
  func.func @transform_1(%arg0: i32) -> (i32, i32, i32) {
    %c0_i32 = arith.constant 0 : i32
    %c0_i32_0 = arith.constant 0 : i32
    %c0_i32_1 = arith.constant 0 : i32
    return %arg0, %c0_i32, %c0_i32_0 : i32, i32, i32
  }
  func.func @transform_2(%arg0: i32) -> (i32, i32) {
    %c0_i32 = arith.constant 0 : i32
    %c0_i32_0 = arith.constant 0 : i32
    %c0_i32_1 = arith.constant 0 : i32
    return %c0_i32, %c0_i32_0 : i32, i32
  }
  func.func @transform_3(%arg0: i32) -> (i32, i32, i32) {
    %c0_i32 = arith.constant 0 : i32
    %c0_i32_0 = arith.constant 0 : i32
    %c0_i32_1 = arith.constant 0 : i32
    %c0_i32_2 = arith.constant 0 : i32
    return %c0_i32, %c0_i32_0, %c0_i32_1 : i32, i32, i32
  }
  func.func @transform_4(%arg0: i32) -> (i32, i32, i32) {
    %c0_i32 = arith.constant 0 : i32
    %c0_i32_0 = arith.constant 0 : i32
    %c0_i32_1 = arith.constant 0 : i32
    return %arg0, %c0_i32, %c0_i32_0 : i32, i32, i32
  }
}

</mosaic_0001>

<llo_original>
// kernel: tile.6
$region0: #{tile.6}
  #allocation0 [shape = 's32[1]{0}', space=sflag, size = 0x4, scoped, tag = 'scoped memory for tile.6']
  %s0 = inlined_call_operand.vmem [shape: f32[8], index: 0, kind: input, shape index: {}]
  %s1 = inlined_call_operand.vmem [shape: f32[16,8], index: 1, kind: output, shape index: {}]
  // Predicated region
  $region2: #{tile.6} parent=0 // pred_check
    _
  $region3: #{tile.6} parent=0 // pred_check_branch
    %3 = sbr.rel (0) target = $region5
  $region4: #{tile.6} parent=0 // pred_region
    _
  $region5: #{tile.6} parent=0 // pred_fallthru
    _
  %v4 = vld [vmem:[%s0] ss:$0 sm:$0xff]
  %5 = vst [vmem:[%s1] sm:$0xff] %v4
  %s6 = scalar_lea.vmem %s1, 8
  %7 = vst [vmem:[%s6] sm:$0xff] %v4

// kernel: tile.7
$region0: #{tile.7}
  %s0 = inlined_call_operand.vmem [shape: f32[16,8], index: 0, kind: input, shape index: {}]
  %s1 = inlined_call_operand.vmem [shape: f32[1,1,128], index: 1, kind: output, shape index: {}]
  $region1: #{tile.7} parent=0
    #allocation0 [shape = 'u8[4096]{0}', space=vmem, size = 0x1000, scoped, tag = 'scoped mem for output reshape']
    %v2 = vld [vmem:[%s0] sm:$0x1]
    %vm3 = vcmask 64512
    %4 = vst.msk [vmem:[#allocation0] sm:$0x1] %vm3, %v2
    %s5 = scalar_lea.vmem %s0, 15
    %v6 = vld [vmem:[%s5] sm:$0x1]
    %7 = vrot.lane.b32.xlu0 %v6, 120
    %v8 = vpop.permute.xlu0 %7
    %vm9 = vcmask 1048512
    %10 = vst.msk [vmem:[#allocation0] sm:$0x1] %vm9, %v8
    %s11 = scalar_lea.vmem %s0, 14
    %v12 = vld [vmem:[%s11] sm:$0x1]
    %13 = vrot.lane.b32.xlu0 %v12, 112
    %v14 = vpop.permute.xlu0 %13
    %vm15 = vcmask 982912
    %16 = vst.msk [vmem:[#allocation0] sm:$0x1] %vm15, %v14
    %s17 = scalar_lea.vmem %s0, 13
    %v18 = vld [vmem:[%s17] sm:$0x1]
    %19 = vrot.lane.b32.xlu0 %v18, 104
    %v20 = vpop.permute.xlu0 %19
    %vm21 = vcmask 917312
    %22 = vst.msk [vmem:[#allocation0] sm:$0x1] %vm21, %v20
    %s23 = scalar_lea.vmem %s0, 12
    %v24 = vld [vmem:[%s23] sm:$0x1]
    %25 = vrot.lane.b32.xlu0 %v24, 96
    %v26 = vpop.permute.xlu0 %25
    %vm27 = vcmask 851712
    %28 = vst.msk [vmem:[#allocation0] sm:$0x1] %vm27, %v26
    %s29 = scalar_lea.vmem %s0, 11
    %v30 = vld [vmem:[%s29] sm:$0x1]
    %31 = vrot.lane.b32.xlu0 %v30, 88
    %v32 = vpop.permute.xlu0 %31
    %vm33 = vcmask 786112
    %34 = vst.msk [vmem:[#allocation0] sm:$0x1] %vm33, %v32
    %s35 = scalar_lea.vmem %s0, 10
    %v36 = vld [vmem:[%s35] sm:$0x1]
    %37 = vrot.lane.b32.xlu0 %v36, 80
    %v38 = vpop.permute.xlu0 %37
    %vm39 = vcmask 720512
    %40 = vst.msk [vmem:[#allocation0] sm:$0x1] %vm39, %v38
    %s41 = scalar_lea.vmem %s0, 9
    %v42 = vld [vmem:[%s41] sm:$0x1]
    %43 = vrot.lane.b32.xlu0 %v42, 72
    %v44 = vpop.permute.xlu0 %43
    %vm45 = vcmask 654912
    %46 = vst.msk [vmem:[#allocation0] sm:$0x1] %vm45, %v44
    %s47 = scalar_lea.vmem %s0, 8
    %v48 = vld [vmem:[%s47] sm:$0x1]
    %49 = vrot.lane.b32.xlu0 %v48, 64
    %v50 = vpop.permute.xlu0 %49
    %vm51 = vcmask 589312
    %52 = vst.msk [vmem:[#allocation0] sm:$0x1] %vm51, %v50
    %s53 = scalar_lea.vmem %s0, 7
    %v54 = vld [vmem:[%s53] sm:$0x1]
    %55 = vrot.lane.b32.xlu0 %v54, 56
    %v56 = vpop.permute.xlu0 %55
    %vm57 = vcmask 523712
    %58 = vst.msk [vmem:[#allocation0] sm:$0x1] %vm57, %v56
    %s59 = scalar_lea.vmem %s0, 6
    %v60 = vld [vmem:[%s59] sm:$0x1]
    %61 = vrot.lane.b32.xlu0 %v60, 48
    %v62 = vpop.permute.xlu0 %61
    %vm63 = vcmask 458112
    %64 = vst.msk [vmem:[#allocation0] sm:$0x1] %vm63, %v62
    %s65 = scalar_lea.vmem %s0, 5
    %v66 = vld [vmem:[%s65] sm:$0x1]
    %67 = vrot.lane.b32.xlu0 %v66, 40
    %v68 = vpop.permute.xlu0 %67
    %vm69 = vcmask 392512
    %70 = vst.msk [vmem:[#allocation0] sm:$0x1] %vm69, %v68
    %s71 = scalar_lea.vmem %s0, 4
    %v72 = vld [vmem:[%s71] sm:$0x1]
    %73 = vrot.lane.b32.xlu0 %v72, 32
    %v74 = vpop.permute.xlu0 %73
    %vm75 = vcmask 326912
    %76 = vst.msk [vmem:[#allocation0] sm:$0x1] %vm75, %v74
    %s77 = scalar_lea.vmem %s0, 3
    %v78 = vld [vmem:[%s77] sm:$0x1]
    %79 = vrot.lane.b32.xlu0 %v78, 24
    %v80 = vpop.permute.xlu0 %79
    %vm81 = vcmask 261312
    %82 = vst.msk [vmem:[#allocation0] sm:$0x1] %vm81, %v80
    %s83 = scalar_lea.vmem %s0, 2
    %v84 = vld [vmem:[%s83] sm:$0x1]
    %85 = vrot.lane.b32.xlu0 %v84, 16
    %v86 = vpop.permute.xlu0 %85
    %vm87 = vcmask 195712
    %88 = vst.msk [vmem:[#allocation0] sm:$0x1] %vm87, %v86
    %s89 = scalar_lea.vmem %s0, 1
    %v90 = vld [vmem:[%s89] sm:$0x1]
    %91 = vrot.lane.b32.xlu0 %v90, 8
    %v92 = vpop.permute.xlu0 %91
    %vm93 = vcmask 130112
    %94 = vst.msk [vmem:[#allocation0] sm:$0x1] %vm93, %v92
    %s96 = sshllo.u32 0, 1
    %v98 = vld [vmem:[#allocation0] sm:%s96]
    %s99 = sshllo.u32 0, 1
    %100 = vst [vmem:[%s1] sm:%s99] %v98

// kernel: node_forward.1
$region0: #{node_forward.1}
  #allocation0 [shape = 'u32[]', space=smem, size = 0x4, offset = 0x4, fixed_abs, tag = 'smem constant byte address 0x4 - core index']
  #allocation1 [shape = 'u32[144,128]{1,0:T(1,128)}', space=vmem, size = 0x12000, scoped, tag = 'internal scratch']
  %s0 = inlined_call_operand.vmem [shape: f32[2,18,144], index: 0, kind: input, shape index: {}]
  %s1 = inlined_call_operand.vmem [shape: f32[2,18,144], index: 1, kind: input, shape index: {}]
  %s2 = inlined_call_operand.vmem [shape: f32[432,128], index: 2, kind: input, shape index: {}]
  %s3 = inlined_call_operand.vmem [shape: f32[1,1,128], index: 3, kind: input, shape index: {}]
  %s4 = inlined_call_operand.vmem [shape: f32[2,16,128], index: 4, kind: output, shape index: {}]
  %s5 = sld [smem:[#allocation0]]
  $region49: #{node_forward.1} parent=0
    _
  %s7 = ssub.s32 1, %s5
  %s8 = scalar_select 0, %s7, %s5
  loop: start=0, step=1, limit=4
  $region2: #{node_forward.1} parent=0 // loop_pre_header
    _
  $region3: #{node_forward.1} parent=0 // loop_header
    %s10 = sphi 0, %s14
    %p11 = scmp.ge.s32.totalorder %s10, 4
    %s20 = sphi 0, %s22
    %s23 = sphi 0, %s20
    %s24 = sphi 0, %s23
    %s40 = sphi 0, %s24
    %s46 = sphi 0, %s48
    %s49 = sphi 0, %s46
    %s50 = sphi 0, %s49
    %s66 = sphi 0, %s50
    %s70 = sphi 0, %s70
    %s72 = sphi 0, %s70
    %s73 = sphi 0, %s72
    %s87 = sphi 0, %s73
    %s91 = sphi 0, %s91
    %s93 = sphi 0, %s91
    %s94 = sphi 0, %s93
    %s108 = sphi 0, %s94
    %s114 = sphi 0, %s116
    %s117 = sphi 0, %s114
    %s118 = sphi 0, %s117
    %s134 = sphi 0, %s118
  $region4: #{node_forward.1} parent=0 // loop_header_branch
    %13 = sbr.rel (%p11) target = $region8
  $region5: #{node_forward.1} parent=0 // loop_body
    %s15 = ssub.s32 %s10, 1
    %s16 = ssub.s32 %s10, 2
    %s17 = sadd.s32 %s10, 1
    %s18 = ssub.s32 %s10, %s17
    %p19 = scmp.eq.s32.totalorder %s18, 0
    %s21 = sadd.s32 %s20, 1
    %s22 = scalar_select %p19, %s20, %s21
    %p25 = pneg %p19
    %p26 = scmp.eq.s32.totalorder %s10, 1
    %p27 = por %p25, %p26
    %p28 = scmp.ne.s32.totalorder %s20, %s23
    %p29 = scmp.eq.s32.totalorder %s10, 0
    %p30 = por %p28, %p29
    %p31 = scmp.ne.s32.totalorder %s20, %s23
    %p32 = scmp.eq.s32.totalorder %s15, 1
    %p33 = por %p31, %p32
    %p34 = scmp.ne.s32.totalorder %s23, %s24
    %p35 = scmp.eq.s32.totalorder %s15, 0
    %p36 = por %p34, %p35
    %p37 = scmp.ne.s32.totalorder %s23, %s24
    %p38 = scmp.eq.s32.totalorder %s16, 1
    %p39 = por %p37, %p38
    %p41 = scmp.ne.s32.totalorder %s24, %s40
    %p42 = scmp.eq.s32.totalorder %s16, 0
    %p43 = por %p41, %p42
    %s44 = ssub.s32 %s10, %s17
    %p45 = scmp.eq.s32.totalorder %s44, 0
    %s47 = sadd.s32 %s46, 1
    %s48 = scalar_select %p45, %s46, %s47
    %p51 = pneg %p45
    %p52 = scmp.eq.s32.totalorder %s10, 1
    %p53 = por %p51, %p52
    %p54 = scmp.ne.s32.totalorder %s46, %s49
    %p55 = scmp.eq.s32.totalorder %s10, 0
    %p56 = por %p54, %p55
    %p57 = scmp.ne.s32.totalorder %s46, %s49
    %p58 = scmp.eq.s32.totalorder %s15, 1
    %p59 = por %p57, %p58
    %p60 = scmp.ne.s32.totalorder %s49, %s50
    %p61 = scmp.eq.s32.totalorder %s15, 0
    %p62 = por %p60, %p61
    %p63 = scmp.ne.s32.totalorder %s49, %s50
    %p64 = scmp.eq.s32.totalorder %s16, 1
    %p65 = por %p63, %p64
    %p67 = scmp.ne.s32.totalorder %s50, %s66
    %p68 = scmp.eq.s32.totalorder %s16, 0
    %p69 = por %p67, %p68
    %s71 = sadd.s32 %s70, 1
    %p74 = scmp.eq.s32.totalorder %s10, 1
    %p75 = scmp.ne.s32.totalorder %s70, %s72
    %p76 = scmp.eq.s32.totalorder %s10, 0
    %p77 = por %p75, %p76
    %p78 = scmp.ne.s32.totalorder %s70, %s72
    %p79 = scmp.eq.s32.totalorder %s15, 1
    %p80 = por %p78, %p79
    %p81 = scmp.ne.s32.totalorder %s72, %s73
    %p82 = scmp.eq.s32.totalorder %s15, 0
    %p83 = por %p81, %p82
    %p84 = scmp.ne.s32.totalorder %s72, %s73
    %p85 = scmp.eq.s32.totalorder %s16, 1
    %p86 = por %p84, %p85
    %p88 = scmp.ne.s32.totalorder %s73, %s87
    %p89 = scmp.eq.s32.totalorder %s16, 0
    %p90 = por %p88, %p89
    %s92 = sadd.s32 %s91, 1
    %p95 = scmp.eq.s32.totalorder %s10, 1
    %p96 = scmp.ne.s32.totalorder %s91, %s93
    %p97 = scmp.eq.s32.totalorder %s10, 0
    %p98 = por %p96, %p97
    %p99 = scmp.ne.s32.totalorder %s91, %s93
    %p100 = scmp.eq.s32.totalorder %s15, 1
    %p101 = por %p99, %p100
    %p102 = scmp.ne.s32.totalorder %s93, %s94
    %p103 = scmp.eq.s32.totalorder %s15, 0
    %p104 = por %p102, %p103
    %p105 = scmp.ne.s32.totalorder %s93, %s94
    %p106 = scmp.eq.s32.totalorder %s16, 1
    %p107 = por %p105, %p106
    %p109 = scmp.ne.s32.totalorder %s94, %s108
    %p110 = scmp.eq.s32.totalorder %s16, 0
    %p111 = por %p109, %p110
    %s112 = ssub.s32 %s10, %s17
    %p113 = scmp.eq.s32.totalorder %s112, 0
    %s115 = sadd.s32 %s114, 1
    %s116 = scalar_select %p113, %s114, %s115
    %p119 = pneg %p113
    %p120 = scmp.eq.s32.totalorder %s10, 1
    %p121 = por %p119, %p120
    %p122 = scmp.ne.s32.totalorder %s114, %s117
    %p123 = scmp.eq.s32.totalorder %s10, 0
    %p124 = por %p122, %p123
    %p125 = scmp.ne.s32.totalorder %s114, %s117
    %p126 = scmp.eq.s32.totalorder %s15, 1
    %p127 = por %p125, %p126
    %p128 = scmp.ne.s32.totalorder %s117, %s118
    %p129 = scmp.eq.s32.totalorder %s15, 0
    %p130 = por %p128, %p129
    %p131 = scmp.ne.s32.totalorder %s117, %s118
    %p132 = scmp.eq.s32.totalorder %s16, 1
    %p133 = por %p131, %p132
    %p135 = scmp.ne.s32.totalorder %s118, %s134
    %p136 = scmp.eq.s32.totalorder %s16, 0
    %p137 = por %p135, %p136
    %p138 = scmp.le.s32.totalorder 1, %s10
    %p139 = scmp.lt.s32.totalorder %s10, 3
    %p140 = pnand %p138, %p139
    %p141 = pneg %p140
    // Predicated region
    $region9: #{node_forward.1} parent=5 // pred_check
      _
    $region10: #{node_forward.1} parent=5 // pred_check_branch
      %143 = sbr.rel (%p140) target = $region12
    $region11: #{node_forward.1} parent=5 // pred_region
      %s144 = ssub.s32 %s10, 1
      // Predicated region
      $region13: #{node_forward.1} parent=11 // pred_check
        %p145 = pneg %p83
      $region14: #{node_forward.1} parent=11 // pred_check_branch
        %147 = sbr.rel (%p145) target = $region16
      $region15: #{node_forward.1} parent=11 // pred_region
        _
      $region16: #{node_forward.1} parent=11 // pred_fallthru
        _
      // Predicated region
      $region17: #{node_forward.1} parent=11 // pred_check
        %p148 = pneg %p104
      $region18: #{node_forward.1} parent=11 // pred_check_branch
        %150 = sbr.rel (%p148) target = $region20
      $region19: #{node_forward.1} parent=11 // pred_region
        _
      $region20: #{node_forward.1} parent=11 // pred_fallthru
        _
    $region12: #{node_forward.1} parent=5 // pred_fallthru
      _
    %p151 = scmp.lt.s32.totalorder %s10, 2
    // Predicated region
    $region21: #{node_forward.1} parent=5 // pred_check
      %p152 = pneg %p151
    $region22: #{node_forward.1} parent=5 // pred_check_branch
      %154 = sbr.rel (%p152) target = $region24
    $region23: #{node_forward.1} parent=5 // pred_region
      // Predicated region
      $region25: #{node_forward.1} parent=23 // pred_check
        %p155 = pneg %p30
      $region26: #{node_forward.1} parent=23 // pred_check_branch
        %157 = sbr.rel (%p155) target = $region28
      $region27: #{node_forward.1} parent=23 // pred_region
        %p158 = scmp.lt.s32.totalorder %s10, 1
        %s159 = scalar_select %p158, %s10, 1
        %s160 = smul.addr %s159, 6
        %s161 = smul.addr %s160, 8
        %s162 = scalar_lea.vmem %s0, %s161
      $region28: #{node_forward.1} parent=23 // pred_fallthru
        _
      // Predicated region
      $region29: #{node_forward.1} parent=23 // pred_check
        %p163 = pneg %p56
      $region30: #{node_forward.1} parent=23 // pred_check_branch
        %165 = sbr.rel (%p163) target = $region32
      $region31: #{node_forward.1} parent=23 // pred_region
        %p166 = scmp.lt.s32.totalorder %s10, 1
        %s167 = scalar_select %p166, %s10, 1
        %s168 = smul.addr %s167, 6
        %s169 = smul.addr %s168, 8
        %s170 = scalar_lea.vmem %s1, %s169
      $region32: #{node_forward.1} parent=23 // pred_fallthru
        _
    $region24: #{node_forward.1} parent=5 // pred_fallthru
      _
    %p171 = scmp.le.s32.totalorder 1, %s10
    %p172 = scmp.lt.s32.totalorder %s10, 3
    %p173 = pnand %p171, %p172
    %p174 = pneg %p173
    // Predicated region
    $region33: #{node_forward.1} parent=5 // pred_check
      _
    $region34: #{node_forward.1} parent=5 // pred_check_branch
      %176 = sbr.rel (%p173) target = $region36
    $region35: #{node_forward.1} parent=5 // pred_region
      %s177 = ssub.s32 %s10, 1
      %p178 = scmp.lt.s32.totalorder %s15, 1
      %s179 = scalar_select %p178, %s15, 1
      %s180 = smul.addr %s179, 6
      %s181 = smul.addr %s180, 8
      %s182 = scalar_lea.vmem %s0, %s181
      %p183 = pneg %p36
      %p184 = pneg %p33
      %p185 = scmp.lt.s32.totalorder %s15, 1
      %s186 = scalar_select %p185, %s15, 1
      %s187 = smul.addr %s186, 6
      %s188 = smul.addr %s187, 8
      %s189 = scalar_lea.vmem %s1, %s188
      %p190 = pneg %p62
      %p191 = pneg %p59
      %p192 = pneg %p83
      %p193 = pneg %p80
      %p194 = pneg %p104
      %p195 = pneg %p101
      %p196 = pneg %p130
      %p197 = pneg %p127
      %p198 = scmp.lt.s32.totalorder %s15, 1
      %s199 = scalar_select %p198, %s15, 1
      %s200 = smul.addr %s199, 2
      %s201 = smul.addr %s200, 8
      %s202 = scalar_lea.vmem %s4, %s201
      %p203 = scmp.lt.s32.totalorder %s15, 1
      %s204 = scalar_select %p203, %s15, 1
      %s205 = smul.addr %s204, 6
      %s206 = smul.addr %s205, 8
      %s207 = scalar_lea.vmem %s0, %s206
      %p208 = scmp.lt.s32.totalorder %s15, 1
      %s209 = scalar_select %p208, %s15, 1
      %s210 = smul.addr %s209, 6
      %s211 = smul.addr %s210, 8
      %s212 = scalar_lea.vmem %s1, %s211
      %p213 = scmp.lt.s32.totalorder %s15, 1
      %s214 = scalar_select %p213, %s15, 1
      %s215 = smul.addr %s214, 2
      %s216 = smul.addr %s215, 8
      %s217 = scalar_lea.vmem %s4, %s216
      %v218 = vld [vmem:[%s207] sm:$0xff]
      %v219 = vld [vmem:[%s207 + $0x8] sm:$0xff]
      %v220 = vld [vmem:[%s207 + $0x10] sm:$0xff]
      %v221 = vld [vmem:[%s207 + $0x18] sm:$0xff]
      %v222 = vld [vmem:[%s207 + $0x20] sm:$0x3]
      %v223 = vld [vmem:[%s207 + $0x28] sm:$0x3]
      %vm230 = vcmask 1046528
      %v231 = vrot.slane %v218, 1
      %v232 = vrot.slane %v220, 1
      %v233 = vsel %vm230, %v231, %v232
      %v234 = vrot.slane %v219, 1
      %v235 = vrot.slane %v221, 1
      %v236 = vsel %vm230, %v234, %v235
      %v237 = vrot.slane %v222, 1
      %v238 = vsel %vm230, %v232, %v237
      %v239 = vrot.slane %v223, 1
      %v240 = vsel %vm230, %v235, %v239
      %241 = vrot.lane.b32.xlu0 %v233, 16
      %v242 = vpop.permute.xlu0 %241
      %243 = vrot.lane.b32.xlu0 %v236, 16
      %v244 = vpop.permute.xlu0 %243
      %245 = vrot.lane.b32.xlu0 %v238, 16
      %v246 = vpop.permute.xlu0 %245
      %247 = vrot.lane.b32.xlu0 %v240, 16
      %v248 = vpop.permute.xlu0 %247
      %vm249 = vcmask 130048
      %v250 = vsel %vm249, %v242, %v244
      %v251 = vsel %vm249, %v246, %v248
      %vm256 = vcmask 1045504
      %v257 = vrot.slane %v218, 2
      %v258 = vrot.slane %v220, 2
      %v259 = vsel %vm256, %v257, %v258
      %v260 = vrot.slane %v219, 2
      %v261 = vrot.slane %v221, 2
      %v262 = vsel %vm256, %v260, %v261
      %v263 = vrot.slane %v222, 2
      %v264 = vsel %vm256, %v258, %v263
      %v265 = vrot.slane %v223, 2
      %v266 = vsel %vm256, %v261, %v265
      %267 = vrot.lane.b32.xlu0 %v259, 32
      %v268 = vpop.permute.xlu0 %267
      %269 = vrot.lane.b32.xlu0 %v262, 32
      %v270 = vpop.permute.xlu0 %269
      %271 = vrot.lane.b32.xlu0 %v264, 32
      %v272 = vpop.permute.xlu0 %271
      %273 = vrot.lane.b32.xlu0 %v266, 32
      %v274 = vpop.permute.xlu0 %273
      %vm275 = vcmask 261120
      %v276 = vsel %vm275, %v268, %v270
      %v277 = vsel %vm275, %v272, %v274
      %v280 = vsel %vm249, %v219, %v242
      %v281 = vsel %vm249, %v221, %v246
      %v282 = vsel %vm275, %v250, %v268
      %v283 = vsel %vm275, %v251, %v272
      %v284 = vld [vmem:[%s2] sm:$0xff]
      %v285 = vld [vmem:[%s2 + $0x8] sm:$0xff]
      %v286 = vld [vmem:[%s2 + $0x10] sm:$0xff]
      %v287 = vld [vmem:[%s2 + $0x18] sm:$0xff]
      %v288 = vld [vmem:[%s2 + $0x20] sm:$0xff]
      %v289 = vld [vmem:[%s2 + $0x28] sm:$0xff]
      %v290 = vld [vmem:[%s2 + $0x30] sm:$0xff]
      %v291 = vld [vmem:[%s2 + $0x38] sm:$0xff]
      %v292 = vld [vmem:[%s2 + $0x40] sm:$0xff]
      %v293 = vld [vmem:[%s2 + $0x48] sm:$0xff]
      %v294 = vld [vmem:[%s2 + $0x50] sm:$0xff]
      %v295 = vld [vmem:[%s2 + $0x58] sm:$0xff]
      %v296 = vld [vmem:[%s2 + $0x60] sm:$0xff]
      %v297 = vld [vmem:[%s2 + $0x68] sm:$0xff]
      %v298 = vld [vmem:[%s2 + $0x70] sm:$0xff]
      %v299 = vld [vmem:[%s2 + $0x78] sm:$0xff]
      %v300 = vld [vmem:[%s2 + $0x80] sm:$0xff]
      %v301 = vld [vmem:[%s2 + $0x88] sm:$0xff]
      %v302 = vld [vmem:[%s2 + $0x90] sm:$0xff]
      %v303 = vld [vmem:[%s2 + $0x98] sm:$0xff]
      %v304 = vld [vmem:[%s2 + $0xa0] sm:$0xff]
      %v305 = vld [vmem:[%s2 + $0xa8] sm:$0xff]
      %v306 = vld [vmem:[%s2 + $0xb0] sm:$0xff]
      %v307 = vld [vmem:[%s2 + $0xb8] sm:$0xff]
      %v308 = vld [vmem:[%s2 + $0xc0] sm:$0xff]
      %v309 = vld [vmem:[%s2 + $0xc8] sm:$0xff]
      %v310 = vld [vmem:[%s2 + $0xd0] sm:$0xff]
      %v311 = vld [vmem:[%s2 + $0xd8] sm:$0xff]
      %v312 = vld [vmem:[%s2 + $0xe0] sm:$0xff]
      %v313 = vld [vmem:[%s2 + $0xe8] sm:$0xff]
      %v314 = vld [vmem:[%s2 + $0xf0] sm:$0xff]
      %v315 = vld [vmem:[%s2 + $0xf8] sm:$0xff]
      %v316 = vld [vmem:[%s2 + $0x100] sm:$0xff]
      %v317 = vld [vmem:[%s2 + $0x108] sm:$0xff]
      %v318 = vld [vmem:[%s2 + $0x110] sm:$0xff]
      %v319 = vld [vmem:[%s2 + $0x118] sm:$0xff]
      %v320 = vld [vmem:[%s2 + $0x120] sm:$0xff]
      %v321 = vld [vmem:[%s2 + $0x128] sm:$0xff]
      %v322 = vld [vmem:[%s2 + $0x130] sm:$0xff]
      %v323 = vld [vmem:[%s2 + $0x138] sm:$0xff]
      %v324 = vld [vmem:[%s2 + $0x140] sm:$0xff]
      %v325 = vld [vmem:[%s2 + $0x148] sm:$0xff]
      %v326 = vld [vmem:[%s2 + $0x150] sm:$0xff]
      %v327 = vld [vmem:[%s2 + $0x158] sm:$0xff]
      %v328 = vld [vmem:[%s2 + $0x160] sm:$0xff]
      %v329 = vld [vmem:[%s2 + $0x168] sm:$0xff]
      %v330 = vld [vmem:[%s2 + $0x170] sm:$0xff]
      %v331 = vld [vmem:[%s2 + $0x178] sm:$0xff]
      %v332 = vld [vmem:[%s2 + $0x180] sm:$0xff]
      %v333 = vld [vmem:[%s2 + $0x188] sm:$0xff]
      %v334 = vld [vmem:[%s2 + $0x190] sm:$0xff]
      %v335 = vld [vmem:[%s2 + $0x198] sm:$0xff]
      %v336 = vld [vmem:[%s2 + $0x1a0] sm:$0xff]
      %v337 = vld [vmem:[%s2 + $0x1a8] sm:$0xff]
      %vm338 = vcmask 392192
      %v339 = vsel %vm338, %v276, 0
      %v341 = vsel %vm338, %v277, 0
      %343 = vmatprep.subr.mxu0 0.0
      %344 = vmatpush1.msra.mxu0 %v284
      %345 = vmatprep.subr.mxu0 0.0
      %346 = vmatpush1.msra.mxu0 %v285
      %347 = vmatprep.subr.mxu0 0.0
      %348 = vmatpush1.msra.mxu0 %v286
      %349 = vmatprep.subr.mxu0 0.0
      %350 = vmatpush1.msra.mxu0 %v287
      %351 = vmatprep.subr.mxu0 0.0
      %352 = vmatpush1.msra.mxu0 %v288
      %353 = vmatprep.subr.mxu0 0.0
      %354 = vmatpush1.msra.mxu0 %v289
      %355 = vmatprep.subr.mxu0 0.0
      %356 = vmatpush1.msra.mxu0 %v290
      %357 = vmatprep.subr.mxu0 0.0
      %358 = vmatpush1.msra.mxu0 %v291
      %359 = vmatprep.subr.mxu0 0.0
      %360 = vmatpush1.msra.mxu0 %v292
      %361 = vmatprep.subr.mxu0 0.0
      %362 = vmatpush1.msra.mxu0 %v293
      %363 = vmatprep.subr.mxu0 0.0
      %364 = vmatpush1.msra.mxu0 %v294
      %365 = vmatprep.subr.mxu0 0.0
      %366 = vmatpush1.msra.mxu0 %v295
      %367 = vmatprep.subr.mxu0 0.0
      %368 = vmatpush1.msra.mxu0 %v296
      %369 = vmatprep.subr.mxu0 0.0
      %370 = vmatpush1.msra.mxu0 %v297
      %371 = vmatprep.subr.mxu0 0.0
      %372 = vmatpush1.msra.mxu0 %v298
      %373 = vmatprep.subr.mxu0 0.0
      %374 = vmatpush1.msra.mxu0 %v299
      %375 = vmatprep.subr.mxu0 0.0
      %376 = vmatpush1.msra.mxu0 %v300
      %377 = vmatprep.subr.mxu0 0.0
      %378 = vmatpush1.msra.mxu0 %v301
      %379 = vmatprep.subr.mxu0 0.0
      %380 = vmatpush1.msra.mxu0 %v302
      %381 = vmatprep.subr.mxu0 0.0
      %382 = vmatpush1.msra.mxu0 %v303
      %383 = vmatprep.subr.mxu0 0.0
      %384 = vmatpush1.msra.mxu0 %v304
      %385 = vmatprep.subr.mxu0 0.0
      %386 = vmatpush1.msra.mxu0 %v305
      %387 = vmatprep.subr.mxu0 0.0
      %388 = vmatpush1.msra.mxu0 %v306
      %389 = vmatprep.subr.mxu0 0.0
      %390 = vmatpush1.msra.mxu0 %v307
      %391 = vmatprep.subr.mxu0 0.0
      %392 = vmatpush1.msra.mxu0 %v308
      %393 = vmatprep.subr.mxu0 0.0
      %394 = vmatpush1.msra.mxu0 %v309
      %395 = vmatprep.subr.mxu0 0.0
      %396 = vmatpush1.msra.mxu0 %v310
      %397 = vmatprep.subr.mxu0 0.0
      %398 = vmatpush1.msra.mxu0 %v311
      %399 = vmatprep.subr.mxu0 0.0
      %400 = vmatpush1.msra.mxu0 %v312
      %401 = vmatprep.subr.mxu0 0.0
      %402 = vmatpush1.msra.mxu0 %v313
      %403 = vmatprep.subr.mxu0 0.0
      %404 = vmatpush1.msra.mxu0 %v314
      %405 = vmatprep.subr.mxu0 0.0
      %406 = vmatpush1.msra.mxu0 %v315
      %407 = vmatprep.mubr.f32.mxu0 %v280
      %408 = vmatmul.mubr.f32.gmra.mrb[0].mxu0 %v218
      %v409 = vpop.f32.mrb[0].mxu0
      %v410 = vadd.f32 0.0, %v409
      %v411 = vpop.f32.mrb[0].mxu0
      %412 = vmatprep.mubr.f32.mxu0 %v281
      %413 = vmatmul.mubr.f32.gmra.mrb[0].mxu0 %v220
      %v414 = vpop.f32.mrb[0].mxu0
      %v415 = vadd.f32 0.0, %v414
      %v416 = vpop.f32.mrb[0].mxu0
      %417 = vdwg.mxu0
      %418 = vmatprep.subr.mxu0 0.0
      %419 = vmatpush1.msra.mxu0 %v316
      %420 = vmatprep.subr.mxu0 0.0
      %421 = vmatpush1.msra.mxu0 %v317
      %422 = vmatprep.subr.mxu0 0.0
      %423 = vmatpush1.msra.mxu0 %v318
      %424 = vmatprep.subr.mxu0 0.0
      %425 = vmatpush1.msra.mxu0 %v319
      %426 = vmatprep.subr.mxu0 0.0
      %427 = vmatpush1.msra.mxu0 %v320
      %428 = vmatprep.subr.mxu0 0.0
      %429 = vmatpush1.msra.mxu0 %v321
      %430 = vmatprep.subr.mxu0 0.0
      %431 = vmatpush1.msra.mxu0 %v322
      %432 = vmatprep.subr.mxu0 0.0
      %433 = vmatpush1.msra.mxu0 %v323
      %434 = vmatprep.subr.mxu0 0.0
      %435 = vmatpush1.msra.mxu0 %v324
      %436 = vmatprep.subr.mxu0 0.0
      %437 = vmatpush1.msra.mxu0 %v325
      %438 = vmatprep.subr.mxu0 0.0
      %439 = vmatpush1.msra.mxu0 %v326
      %440 = vmatprep.subr.mxu0 0.0
      %441 = vmatpush1.msra.mxu0 %v327
      %442 = vmatprep.subr.mxu0 0.0
      %443 = vmatpush1.msra.mxu0 %v328
      %444 = vmatprep.subr.mxu0 0.0
      %445 = vmatpush1.msra.mxu0 %v329
      %446 = vmatprep.subr.mxu0 0.0
      %447 = vmatpush1.msra.mxu0 %v330
      %448 = vmatprep.subr.mxu0 0.0
      %449 = vmatpush1.msra.mxu0 %v331
      %450 = vmatprep.subr.mxu0 0.0
      %451 = vmatpush1.msra.mxu0 %v332
      %452 = vmatprep.subr.mxu0 0.0
      %453 = vmatpush1.msra.mxu0 %v333
      %454 = vmatprep.subr.mxu0 0.0
      %455 = vmatpush1.msra.mxu0 %v334
      %456 = vmatprep.subr.mxu0 0.0
      %457 = vmatpush1.msra.mxu0 %v335
      %458 = vmatprep.subr.mxu0 0.0
      %459 = vmatpush1.msra.mxu0 %v336
      %460 = vmatprep.subr.mxu0 0.0
      %461 = vmatpush1.msra.mxu0 %v337
      %462 = vmatprep.subr.mxu0 0.0
      %463 = vmatpush1.msra.mxu0 0.0
      %464 = vmatprep.subr.mxu0 0.0
      %465 = vmatpush1.msra.mxu0 0.0
      %466 = vmatprep.subr.mxu0 0.0
      %467 = vmatpush1.msra.mxu0 0.0
      %468 = vmatprep.subr.mxu0 0.0
      %469 = vmatpush1.msra.mxu0 0.0
      %470 = vmatprep.subr.mxu0 0.0
      %471 = vmatpush1.msra.mxu0 0.0
      %472 = vmatprep.subr.mxu0 0.0
      %473 = vmatpush1.msra.mxu0 0.0
      %474 = vmatprep.subr.mxu0 0.0
      %475 = vmatpush1.msra.mxu0 0.0
      %476 = vmatprep.subr.mxu0 0.0
      %477 = vmatpush1.msra.mxu0 0.0
      %478 = vmatprep.subr.mxu0 0.0
      %479 = vmatpush1.msra.mxu0 0.0
      %480 = vmatprep.subr.mxu0 0.0
      %481 = vmatpush1.msra.mxu0 0.0
      %482 = vmatprep.mubr.f32.mxu0 %v339
      %483 = vmatmul.mubr.f32.gmra.mrb[0].mxu0 %v282
      %v484 = vpop.f32.mrb[0].mxu0
      %v485 = vadd.f32 %v410, %v484
      %v486 = vpop.f32.mrb[0].mxu0
      %487 = vmatprep.mubr.f32.mxu0 %v341
      %488 = vmatmul.mubr.f32.gmra.mrb[0].mxu0 %v283
      %v489 = vpop.f32.mrb[0].mxu0
      %v490 = vadd.f32 %v415, %v489
      %v491 = vpop.f32.mrb[0].mxu0
      %492 = vdwg.mxu0
      %v493 = vld [vmem:[%s3] sm:$0x1]
      %v495 = vlaneseq
      %v496 = vshrl.u32 %v495, 7
      %v497 = vsub.s32 0, %v496
      %v498 = vrot.slane %v493, %v497
      %v500 = vadd.f32 %v485, %v498
      %v501 = vadd.f32 %v490, %v498
      %v502 = vmax.f32 %v500, 0.0
      %v503 = vmax.f32 %v501, 0.0
      %v504 = vld [vmem:[%s212] sm:$0xff]
      %v505 = vld [vmem:[%s212 + $0x8] sm:$0xff]
      %v506 = vld [vmem:[%s212 + $0x10] sm:$0xff]
      %v507 = vld [vmem:[%s212 + $0x18] sm:$0xff]
      %v508 = vld [vmem:[%s212 + $0x20] sm:$0x3]
      %v509 = vld [vmem:[%s212 + $0x28] sm:$0x3]
      %v516 = vrot.slane %v504, 1
      %v517 = vrot.slane %v506, 1
      %v518 = vsel %vm230, %v516, %v517
      %v519 = vrot.slane %v505, 1
      %v520 = vrot.slane %v507, 1
      %v521 = vsel %vm230, %v519, %v520
      %v522 = vrot.slane %v508, 1
      %v523 = vsel %vm230, %v517, %v522
      %v524 = vrot.slane %v509, 1
      %v525 = vsel %vm230, %v520, %v524
      %v530 = vmax.f32 %v504, %v518
      %v531 = vmax.f32 %v505, %v521
      %v532 = vmax.f32 %v506, %v523
      %v533 = vmax.f32 %v507, %v525
      %v534 = vrot.slane %v504, 2
      %v535 = vrot.slane %v506, 2
      %v536 = vsel %vm256, %v534, %v535
      %v537 = vrot.slane %v505, 2
      %v538 = vrot.slane %v507, 2
      %v539 = vsel %vm256, %v537, %v538
      %v540 = vrot.slane %v508, 2
      %v541 = vsel %vm256, %v535, %v540
      %v542 = vrot.slane %v509, 2
      %v543 = vsel %vm256, %v538, %v542
      %v548 = vmax.f32 %v530, %v536
      %v549 = vmax.f32 %v531, %v539
      %v550 = vmax.f32 %v532, %v541
      %v551 = vmax.f32 %v533, %v543
      %556 = vrot.lane.b32.xlu0 %v548, 120
      %v557 = vpop.permute.xlu0 %556
      %558 = vrot.lane.b32.xlu0 %v549, 120
      %v559 = vpop.permute.xlu0 %558
      %560 = vrot.lane.b32.xlu0 %v550, 120
      %v561 = vpop.permute.xlu0 %560
      %562 = vrot.lane.b32.xlu0 %v551, 120
      %v563 = vpop.permute.xlu0 %562
      %vm564 = vcmask 982016
      %v565 = vsel %vm564, %v557, %v559
      %v566 = vsel %vm564, %v561, %v563
      %v569 = vmax.f32 %v548, %v565
      %v570 = vmax.f32 %v550, %v566
      %571 = vrot.lane.b32.xlu0 %v548, 112
      %v572 = vpop.permute.xlu0 %571
      %573 = vrot.lane.b32.xlu0 %v549, 112
      %v574 = vpop.permute.xlu0 %573
      %575 = vrot.lane.b32.xlu0 %v550, 112
      %v576 = vpop.permute.xlu0 %575
      %577 = vrot.lane.b32.xlu0 %v551, 112
      %v578 = vpop.permute.xlu0 %577
      %vm579 = vcmask 916480
      %v580 = vsel %vm579, %v572, %v574
      %v581 = vsel %vm579, %v576, %v578
      %v584 = vmax.f32 %v569, %v580
      %v585 = vmax.f32 %v570, %v581
      %v586 = vadd.f32 %v502, %v584
      %v587 = vadd.f32 %v503, %v585
      %588 = vst [vmem:[%s217] sm:$0xff] %v586
      %589 = vst [vmem:[%s217 + $0x8] sm:$0xff] %v587
      %p590 = scmp.lt.s32.totalorder %s15, 1
      %s591 = scalar_select %p590, %s15, 1
      %s592 = smul.addr %s591, 2
      %s593 = smul.addr %s592, 8
      %s594 = scalar_lea.vmem %s4, %s593
      // Predicated region
      $region37: #{node_forward.1} parent=35 // pred_check
        %p595 = pneg %p127
      $region38: #{node_forward.1} parent=35 // pred_check_branch
        %597 = sbr.rel (%p595) target = $region40
      $region39: #{node_forward.1} parent=35 // pred_region
        _
      $region40: #{node_forward.1} parent=35 // pred_fallthru
        _
    $region36: #{node_forward.1} parent=5 // pred_fallthru
      _
    %p598 = scmp.le.s32.totalorder 2, %s10
    // Predicated region
    $region41: #{node_forward.1} parent=5 // pred_check
      %p599 = pneg %p598
    $region42: #{node_forward.1} parent=5 // pred_check_branch
      %601 = sbr.rel (%p599) target = $region44
    $region43: #{node_forward.1} parent=5 // pred_region
      %s602 = ssub.s32 %s10, 2
      // Predicated region
      $region45: #{node_forward.1} parent=43 // pred_check
        %p603 = pneg %p133
      $region46: #{node_forward.1} parent=43 // pred_check_branch
        %605 = sbr.rel (%p603) target = $region48
      $region47: #{node_forward.1} parent=43 // pred_region
        %p606 = scmp.lt.s32.totalorder %s16, 1
        %s607 = scalar_select %p606, %s16, 1
        %s608 = smul.addr %s607, 2
        %s609 = smul.addr %s608, 8
        %s610 = scalar_lea.vmem %s4, %s609
      $region48: #{node_forward.1} parent=43 // pred_fallthru
        _
    $region44: #{node_forward.1} parent=5 // pred_fallthru
      _
  $region6: #{node_forward.1} parent=0 // loop_footer
    %s14 = sadd.s32 1, %s10
  $region7: #{node_forward.1} parent=0 // loop_footer_branch
    %9 = sbr.rel target = $region3
  $region8: #{node_forward.1} parent=0 // loop_exit
    _

</llo_original>
